<compile_context>
chip_gen: v7x
topology: tpu7x:2x2x1
jax: 0.10.0
libtpu: 0.0.40
codegen_flags: <defaults>
</compile_context>

<pallas_src>
import functools

import jax
import jax.numpy as jnp
from jax.experimental import pallas as pl
from jax.experimental.pallas import tpu as pltpu


def _round_up(x, m):
    return ((x + m - 1) // m) * m


def mlp_kernel(x_ref, w1_ref, b1_ref, w2_ref, b2_ref, o_ref):
    # x_ref: (TILE_B, IN) f32, w1_ref: (IN, HID_P) bf16, b1_ref: (1, HID_P) f32,
    # w2_ref: (HID_P, OUT_P) bf16, b2_ref: (1, OUT_P) f32, o_ref: (TILE_B, OUT_P) f32
    x = x_ref[...].astype(jnp.bfloat16)                       # cast in-kernel (VPU)
    # First layer: bf16 MXU matmul with f32 accumulation; bias + ReLU in f32 on VPU.
    h = jnp.dot(x, w1_ref[...], preferred_element_type=jnp.float32)
    h = jnp.maximum(h + b1_ref[...], 0.0)
    # Second layer: cast the activation back to bf16 to feed the MXU, accumulate f32.
    y = jnp.dot(h.astype(jnp.bfloat16), w2_ref[...],
                preferred_element_type=jnp.float32)
    o_ref[...] = (y + b2_ref[...]).astype(o_ref.dtype)


def prepare_params(w1, b1, w2, b2):
    """One-time padding/casting of weights & biases (hoisted out of the fwd path).

    w1: (in, hid), b1: (1, hid), w2: (hid, out), b2: (1, out) -- all f32.
    Returns lane-dense padded params; padding columns/rows are zero so results in
    the valid output region are unchanged.
    """
    in_num, hid_num = w1.shape
    out_num = w2.shape[1]
    HID_P = _round_up(hid_num, 128)
    OUT_P = _round_up(out_num, 128)
    w1_p = jnp.zeros((in_num, HID_P), jnp.bfloat16).at[:, :hid_num].set(
        w1.astype(jnp.bfloat16))
    b1_p = jnp.zeros((1, HID_P), jnp.float32).at[:, :hid_num].set(
        b1.astype(jnp.float32))
    w2_p = jnp.zeros((HID_P, OUT_P), jnp.bfloat16).at[:hid_num, :out_num].set(
        w2.astype(jnp.bfloat16))
    b2_p = jnp.zeros((1, OUT_P), jnp.float32).at[:, :out_num].set(
        b2.astype(jnp.float32))
    return w1_p, b1_p, w2_p, b2_p


def _choose_batch_tile(batch, max_tile_b):
    """Batch tile: multiple of 16 (packed bf16 sublanes); >=2 grid steps when the
    batch allows it so both TensorCores get work on v7x; capped by max_tile_b."""
    b16 = _round_up(batch, 16)
    if b16 <= 16:
        return 16, 16
    tile = min(max_tile_b, _round_up((b16 + 1) // 2, 16))
    return tile, _round_up(b16, tile)


@functools.partial(jax.jit, static_argnames=("out_num", "max_tile_b"))
def net_forward(x, w1_p, b1_p, w2_p, b2_p, *, out_num, max_tile_b=1024):
    """relu(x @ w1 + b1) @ w2 + b2 via one fused Pallas kernel.

    Expects padded params from prepare_params().  Per call it only pads x's batch
    dim (when needed), runs a parallel batch grid with VMEM-resident weights, and
    slices padding off the result.
    """
    batch, in_num = x.shape
    HID_P = w1_p.shape[1]
    OUT_P = w2_p.shape[1]

    TILE_B, B_P = _choose_batch_tile(batch, max_tile_b)
    if B_P != batch:
        # NOTE: padded batch rows of the raw output hold relu(b1) @ W2 + b2; they
        # are sliced off below and must never be reduced over before the slice.
        x_in = jnp.zeros((B_P, in_num), x.dtype).at[:batch].set(x)
    else:
        x_in = x

    out_p = pl.pallas_call(
        mlp_kernel,
        out_shape=jax.ShapeDtypeStruct((B_P, OUT_P), jnp.float32),
        grid_spec=pltpu.PrefetchScalarGridSpec(
            num_scalar_prefetch=0,
            grid=(B_P // TILE_B,),
            in_specs=[
                pl.BlockSpec((TILE_B, in_num), lambda i: (i, 0)),  # x tile per step
                pl.BlockSpec((in_num, HID_P), lambda i: (0, 0)),   # weights resident
                pl.BlockSpec((1, HID_P), lambda i: (0, 0)),
                pl.BlockSpec((HID_P, OUT_P), lambda i: (0, 0)),
                pl.BlockSpec((1, OUT_P), lambda i: (0, 0)),
            ],
            out_specs=pl.BlockSpec((TILE_B, OUT_P), lambda i: (i, 0)),
        ),
        compiler_params=pltpu.CompilerParams(
            dimension_semantics=("parallel",),
        ),
    )(x_in, w1_p, b1_p, w2_p, b2_p)

    return out_p[:batch, :out_num]


def init_params(key, input_num, hidden_num, output_num):
    """Deterministic synthetic init (mirrors nn.Linear's uniform(-1/sqrt(fan_in), ...))."""
    k1, k2, k3, k4 = jax.random.split(key, 4)
    lim1 = 1.0 / jnp.sqrt(input_num)
    lim2 = 1.0 / jnp.sqrt(hidden_num)
    # stored as [in, out] so the kernel does x @ W
    w1 = jax.random.uniform(k1, (input_num, hidden_num), jnp.float32, -lim1, lim1)
    b1 = jax.random.uniform(k2, (1, hidden_num), jnp.float32, -lim1, lim1)
    w2 = jax.random.uniform(k3, (hidden_num, output_num), jnp.float32, -lim2, lim2)
    b2 = jax.random.uniform(k4, (1, output_num), jnp.float32, -lim2, lim2)
    return w1, b1, w2, b2


if __name__ == "__main__":
    input_num, hidden_num, output_num = 16, 32, 8
    batch = 8

    key = jax.random.PRNGKey(0)
    kx, kp = jax.random.split(key)
    x = jax.random.normal(kx, (batch, input_num), jnp.float32)
    w1, b1, w2, b2 = init_params(kp, input_num, hidden_num, output_num)

    # One-time param preparation (pad + cast), hoisted out of the per-call path.
    w1_p, b1_p, w2_p, b2_p = jax.block_until_ready(prepare_params(w1, b1, w2, b2))

    out = net_forward(x, w1_p, b1_p, w2_p, b2_p, out_num=output_num)
    jax.block_until_ready(out)
    assert out.shape == (batch, output_num)

    # Reference following the same bf16-input / f32-accumulate numeric path.
    xb = x.astype(jnp.bfloat16).astype(jnp.float32)
    w1b = w1.astype(jnp.bfloat16).astype(jnp.float32)
    w2b = w2.astype(jnp.bfloat16).astype(jnp.float32)
    h_ref = jnp.maximum(xb @ w1b + b1, 0.0)
    ref_bf16_path = h_ref.astype(jnp.bfloat16).astype(jnp.float32) @ w2b + b2
    assert jnp.allclose(out, ref_bf16_path, atol=1e-4, rtol=1e-4)

    # Loose sanity check against the pure-f32 math of the original module.
    ref_f32 = jnp.maximum(x @ w1 + b1, 0.0) @ w2 + b2
    assert jnp.allclose(out, ref_f32, atol=5e-2, rtol=5e-2)

    print("KERNEL_OK")
</pallas_src>

<mosaic_0001>
module attributes {stable_mosaic.version = 11 : i64} {
  func.func @mlp_kernel(%arg0: i32, %arg1: memref<16x16xf32, #tpu.memory_space<vmem>>, %arg2: memref<16x128xbf16, #tpu.memory_space<vmem>>, %arg3: memref<1x128xf32, #tpu.memory_space<vmem>>, %arg4: memref<128x128xbf16, #tpu.memory_space<vmem>>, %arg5: memref<1x128xf32, #tpu.memory_space<vmem>>, %arg6: memref<16x128xf32, #tpu.memory_space<vmem>>) attributes {dimension_semantics = [#tpu.dimension_semantics<parallel>], iteration_bounds = array<i64: 1>, scalar_prefetch = 0 : i64, scratch_operands = 0 : i64, tpu.core_type = #tpu.core_type<tc>, window_params = [{transform_indices = @transform_0, window_bounds = array<i64: 16, 16>}, {pipeline_mode = #tpu.pipeline_mode<synchronous>, transform_indices = @transform_1, window_bounds = array<i64: 16, 128>}, {pipeline_mode = #tpu.pipeline_mode<synchronous>, transform_indices = @transform_2, window_bounds = array<i64: 1, 128>}, {pipeline_mode = #tpu.pipeline_mode<synchronous>, transform_indices = @transform_3, window_bounds = array<i64: 128, 128>}, {pipeline_mode = #tpu.pipeline_mode<synchronous>, transform_indices = @transform_4, window_bounds = array<i64: 1, 128>}, {transform_indices = @transform_5, window_bounds = array<i64: 16, 128>}]} {
    %c0 = arith.constant 0 : index
    %c0_0 = arith.constant 0 : index
    %0 = vector.load %arg1[%c0, %c0_0] : memref<16x16xf32, #tpu.memory_space<vmem>>, vector<16x16xf32>
    %1 = arith.truncf %0 : vector<16x16xf32> to vector<16x16xbf16>
    %c0_1 = arith.constant 0 : index
    %c0_2 = arith.constant 0 : index
    %2 = vector.load %arg2[%c0_1, %c0_2] : memref<16x128xbf16, #tpu.memory_space<vmem>>, vector<16x128xbf16>
    %cst = arith.constant dense<0.000000e+00> : vector<16x128xf32>
    %3 = tpu.matmul %1, %2, %cst {dimension_numbers = #tpu.dot_dimension_numbers<[1], [0], [0], [1], [0, 0, 1, 1], [], []>} : vector<16x16xbf16>, vector<16x128xbf16>, vector<16x128xf32> -> vector<16x128xf32>
    %c0_3 = arith.constant 0 : index
    %c0_4 = arith.constant 0 : index
    %4 = vector.load %arg3[%c0_3, %c0_4] : memref<1x128xf32, #tpu.memory_space<vmem>>, vector<1x128xf32>
    %5 = vector.broadcast %4 : vector<1x128xf32> to vector<16x128xf32>
    %6 = arith.addf %3, %5 : vector<16x128xf32>
    %cst_5 = arith.constant 0.000000e+00 : f32
    %7 = vector.broadcast %cst_5 : f32 to vector<16x128xf32>
    %8 = arith.maximumf %6, %7 : vector<16x128xf32>
    %9 = arith.truncf %8 : vector<16x128xf32> to vector<16x128xbf16>
    %c0_6 = arith.constant 0 : index
    %c0_7 = arith.constant 0 : index
    %10 = vector.load %arg4[%c0_6, %c0_7] : memref<128x128xbf16, #tpu.memory_space<vmem>>, vector<128x128xbf16>
    %cst_8 = arith.constant dense<0.000000e+00> : vector<16x128xf32>
    %11 = tpu.matmul %9, %10, %cst_8 {dimension_numbers = #tpu.dot_dimension_numbers<[1], [0], [0], [1], [0, 0, 1, 1], [], []>} : vector<16x128xbf16>, vector<128x128xbf16>, vector<16x128xf32> -> vector<16x128xf32>
    %c0_9 = arith.constant 0 : index
    %c0_10 = arith.constant 0 : index
    %12 = vector.load %arg5[%c0_9, %c0_10] : memref<1x128xf32, #tpu.memory_space<vmem>>, vector<1x128xf32>
    %13 = vector.broadcast %12 : vector<1x128xf32> to vector<16x128xf32>
    %14 = arith.addf %11, %13 : vector<16x128xf32>
    %c0_11 = arith.constant 0 : index
    %c0_12 = arith.constant 0 : index
    %15 = vector.load %arg6[%c0_11, %c0_12] : memref<16x128xf32, #tpu.memory_space<vmem>>, vector<16x128xf32>
    tpu.vector_store %arg6[%c0_11, %c0_12], %14 {strides = array<i32>} : memref<16x128xf32, #tpu.memory_space<vmem>>, vector<16x128xf32>,
    return
  }
  func.func @transform_0(%arg0: i32) -> (i32, i32) {
    %c0_i32 = arith.constant 0 : i32
    %c0_i32_0 = arith.constant 0 : i32
    return %arg0, %c0_i32 : i32, i32
  }
  func.func @transform_1(%arg0: i32) -> (i32, i32) {
    %c0_i32 = arith.constant 0 : i32
    %c0_i32_0 = arith.constant 0 : i32
    %c0_i32_1 = arith.constant 0 : i32
    return %c0_i32, %c0_i32_0 : i32, i32
  }
  func.func @transform_2(%arg0: i32) -> (i32, i32) {
    %c0_i32 = arith.constant 0 : i32
    %c0_i32_0 = arith.constant 0 : i32
    %c0_i32_1 = arith.constant 0 : i32
    return %c0_i32, %c0_i32_0 : i32, i32
  }
  func.func @transform_3(%arg0: i32) -> (i32, i32) {
    %c0_i32 = arith.constant 0 : i32
    %c0_i32_0 = arith.constant 0 : i32
    %c0_i32_1 = arith.constant 0 : i32
    return %c0_i32, %c0_i32_0 : i32, i32
  }
  func.func @transform_4(%arg0: i32) -> (i32, i32) {
    %c0_i32 = arith.constant 0 : i32
    %c0_i32_0 = arith.constant 0 : i32
    %c0_i32_1 = arith.constant 0 : i32
    return %c0_i32, %c0_i32_0 : i32, i32
  }
  func.func @transform_5(%arg0: i32) -> (i32, i32) {
    %c0_i32 = arith.constant 0 : i32
    %c0_i32_0 = arith.constant 0 : i32
    return %arg0, %c0_i32 : i32, i32
  }
}

</mosaic_0001>

<llo_original>
// kernel: net_forward.1
$region0: #{net_forward.1}
  #allocation0 [shape = 'u32[]', space=smem, size = 0x4, offset = 0x4, fixed_abs, tag = 'smem constant byte address 0x4 - core index']
  #allocation1 [shape = 'u32[144,128]{1,0:T(1,128)}', space=vmem, size = 0x12000, scoped, tag = 'internal scratch']
  %s0 = inlined_call_operand.vmem [shape: f32[16,16], index: 0, kind: input, shape index: {}]
  %s1 = inlined_call_operand.vmem [shape: bf16[16,128], index: 1, kind: input, shape index: {}]
  %s2 = inlined_call_operand.vmem [shape: f32[1,128], index: 2, kind: input, shape index: {}]
  %s3 = inlined_call_operand.hbm [shape: bf16[128,128], index: 3, kind: input, shape index: {}]
  %s4 = inlined_call_operand.vmem [shape: f32[1,128], index: 4, kind: input, shape index: {}]
  %s5 = inlined_call_operand.vmem [shape: f32[16,128], index: 5, kind: output, shape index: {}]
  %s6 = sld [smem:[#allocation0]]
  $region34: #{net_forward.1} parent=0
    _
  %s8 = ssub.s32 1, %s6
  %s9 = scalar_select 0, %s8, %s6
  $region1: #{net_forward.1} parent=0
    #allocation2 [shape = 'u8[32768]{0}', space=vmem, size = 0x8000, scoped, tag = 'input window, operand 3, single buffered']
    #allocation3 [shape = 's32[1]{0}', space=sflag, size = 0x4, scoped, tag = 'scoped memory for net_forward.1']
    %10 = vsyncpa [#allocation3], 0
    // Predicated region
    $region2: #{net_forward.1} parent=1 // pred_check
      _
    $region3: #{net_forward.1} parent=1 // pred_check_branch
      %12 = sbr.rel (0) target = $region5
    $region4: #{net_forward.1} parent=1 // pred_region
      _
    $region5: #{net_forward.1} parent=1 // pred_fallthru
      _
    // Predicated region
    $region6: #{net_forward.1} parent=1 // pred_check
      _
    $region7: #{net_forward.1} parent=1 // pred_check_branch
      %14 = sbr.rel (0) target = $region9
    $region8: #{net_forward.1} parent=1 // pred_region
      _
    $region9: #{net_forward.1} parent=1 // pred_fallthru
      _
    // Predicated region
    $region10: #{net_forward.1} parent=1 // pred_check
      _
    $region11: #{net_forward.1} parent=1 // pred_check_branch
      %16 = sbr.rel (0) target = $region13
    $region12: #{net_forward.1} parent=1 // pred_region
      _
    $region13: #{net_forward.1} parent=1 // pred_fallthru
      _
    // Predicated region
    $region14: #{net_forward.1} parent=1 // pred_check
      _
    $region15: #{net_forward.1} parent=1 // pred_check_branch
      %18 = sbr.rel (0) target = $region17
    $region16: #{net_forward.1} parent=1 // pred_region
      %s20 = ssub.s32 1024, 1024
      %21 = vsyncadd [#allocation3], %s20
      %s22 = sshll.u32 [#allocation2], 4
      %s23 = int_to_ptr.vmem [resolvable:$true] %s22
      %28 = dma.hbm_to_vmem [thread:$0]  %s3, 1024, %s23, [#allocation3], 64, 64, 4
    $region17: #{net_forward.1} parent=1 // pred_fallthru
      _
    // Predicated region
    $region18: #{net_forward.1} parent=1 // pred_check
      _
    $region19: #{net_forward.1} parent=1 // pred_check_branch
      %30 = sbr.rel (0) target = $region21
    $region20: #{net_forward.1} parent=1 // pred_region
      _
    $region21: #{net_forward.1} parent=1 // pred_fallthru
      _
    // Predicated region
    $region22: #{net_forward.1} parent=1 // pred_check
      _
    $region23: #{net_forward.1} parent=1 // pred_check_branch
      %32 = sbr.rel (0) target = $region25
    $region24: #{net_forward.1} parent=1 // pred_region
      %33 = dma.done [#allocation3], 1024
    $region25: #{net_forward.1} parent=1 // pred_fallthru
      _
    %v35 = vld [vmem:[%s0] sm:$0xff]
    %v36 = vld [vmem:[%s0 + $0x8] sm:$0xff]
    %v37 = vpack.c.bf16 %v36, %v35
    %v38 = vld [vmem:[%s1] sm:$0xf]
    %v39 = vld [vmem:[%s1 + $0x4] sm:$0xf]
    %v40 = vld [vmem:[%s2] sm:$0x1]
    %v42 = vlaneseq
    %v43 = vshrl.u32 %v42, 7
    %v44 = vsub.s32 0, %v43
    %v45 = vrot.slane %v40, %v44
    %v49 = vunpack.c.l.b16 %v38
    %v50 = vunpack.c.l.b16 %v39
    %v51 = vpack.c.b16 %v50, %v49
    %vm53 = vcmask 130048
    %v55 = vsel %vm53, %v37, 0
    %57 = vmatprep.subr.bf16.mxu0 0
    %58 = vmatpush1.bf16.msra.mxu0 %v51
    %59 = vmatprep.subr.bf16.mxu0 0
    %60 = vmatpush1.bf16.msra.mxu0 0
    %61 = vmatprep.subr.bf16.mxu0 0
    %62 = vmatpush1.bf16.msra.mxu0 0
    %63 = vmatprep.subr.bf16.mxu0 0
    %64 = vmatpush1.bf16.msra.mxu0 0
    %65 = vmatprep.subr.bf16.mxu0 0
    %66 = vmatpush1.bf16.msra.mxu0 0
    %67 = vmatprep.subr.bf16.mxu0 0
    %68 = vmatpush1.bf16.msra.mxu0 0
    %69 = vmatprep.subr.bf16.mxu0 0
    %70 = vmatpush1.bf16.msra.mxu0 0
    %71 = vmatprep.subr.bf16.mxu0 0
    %72 = vmatpush1.bf16.msra.mxu0 0
    %73 = vmatprep.subr.bf16.mxu0 0
    %74 = vmatpush1.bf16.msra.mxu0 0
    %75 = vmatprep.subr.bf16.mxu0 0
    %76 = vmatpush1.bf16.msra.mxu0 0
    %77 = vmatprep.subr.bf16.mxu0 0
    %78 = vmatpush1.bf16.msra.mxu0 0
    %79 = vmatprep.subr.bf16.mxu0 0
    %80 = vmatpush1.bf16.msra.mxu0 0
    %81 = vmatprep.subr.bf16.mxu0 0
    %82 = vmatpush1.bf16.msra.mxu0 0
    %83 = vmatprep.subr.bf16.mxu0 0
    %84 = vmatpush1.bf16.msra.mxu0 0
    %85 = vmatprep.subr.bf16.mxu0 0
    %86 = vmatpush1.bf16.msra.mxu0 0
    %87 = vmatprep.subr.bf16.mxu0 0
    %88 = vmatpush1.bf16.msra.mxu0 0
    %89 = vmatprep.mubr.bf16.mxu0 0
    %90 = vmatmul.mubr.bf16.gmra.mrb[0].mxu0 %v55
    %v91 = vpop.f32.mrb[0].mxu0
    %v92 = vadd.f32 %v45, %v91
    %v93 = vpop.f32.mrb[0].mxu0
    %v94 = vpop.f32.mrb[0].mxu0
    %v95 = vadd.f32 %v45, %v94
    %v96 = vpop.f32.mrb[0].mxu0
    %97 = vdwg.mxu0
    %v98 = vmax.f32 %v92, 0.0
    %v99 = vmax.f32 %v95, 0.0
    %v100 = vpack.c.bf16 %v99, %v98
    %v101 = vld [vmem:[#allocation2] sm:$0xf]
    %v102 = vld [vmem:[#allocation2 + $0x4] sm:$0xf]
    %v103 = vld [vmem:[#allocation2 + $0x8] sm:$0xf]
    %v104 = vld [vmem:[#allocation2 + $0xc] sm:$0xf]
    %v105 = vld [vmem:[#allocation2 + $0x10] sm:$0xf]
    %v106 = vld [vmem:[#allocation2 + $0x14] sm:$0xf]
    %v107 = vld [vmem:[#allocation2 + $0x18] sm:$0xf]
    %v108 = vld [vmem:[#allocation2 + $0x1c] sm:$0xf]
    %v109 = vld [vmem:[#allocation2 + $0x20] sm:$0xf]
    %v110 = vld [vmem:[#allocation2 + $0x24] sm:$0xf]
    %v111 = vld [vmem:[#allocation2 + $0x28] sm:$0xf]
    %v112 = vld [vmem:[#allocation2 + $0x2c] sm:$0xf]
    %v113 = vld [vmem:[#allocation2 + $0x30] sm:$0xf]
    %v114 = vld [vmem:[#allocation2 + $0x34] sm:$0xf]
    %v115 = vld [vmem:[#allocation2 + $0x38] sm:$0xf]
    %v116 = vld [vmem:[#allocation2 + $0x3c] sm:$0xf]
    %v117 = vld [vmem:[%s4] sm:$0x1]
    %v119 = vlaneseq
    %v120 = vshrl.u32 %v119, 7
    %v121 = vsub.s32 0, %v120
    %v122 = vrot.slane %v117, %v121
    %v140 = vunpack.c.l.b16 %v101
    %v141 = vunpack.c.l.b16 %v102
    %v142 = vunpack.c.l.b16 %v103
    %v143 = vunpack.c.l.b16 %v104
    %v144 = vunpack.c.l.b16 %v105
    %v145 = vunpack.c.l.b16 %v106
    %v146 = vunpack.c.l.b16 %v107
    %v147 = vunpack.c.l.b16 %v108
    %v148 = vunpack.c.l.b16 %v109
    %v149 = vunpack.c.l.b16 %v110
    %v150 = vunpack.c.l.b16 %v111
    %v151 = vunpack.c.l.b16 %v112
    %v152 = vunpack.c.l.b16 %v113
    %v153 = vunpack.c.l.b16 %v114
    %v154 = vunpack.c.l.b16 %v115
    %v155 = vunpack.c.l.b16 %v116
    %v156 = vpack.c.b16 %v141, %v140
    %v157 = vpack.c.b16 %v143, %v142
    %v158 = vpack.c.b16 %v145, %v144
    %v159 = vpack.c.b16 %v147, %v146
    %v160 = vpack.c.b16 %v149, %v148
    %v161 = vpack.c.b16 %v151, %v150
    %v162 = vpack.c.b16 %v153, %v152
    %v163 = vpack.c.b16 %v155, %v154
    %172 = vmatprep.subr.bf16.mxu0 0
    %173 = vmatpush1.bf16.msra.mxu0 %v156
    %174 = vmatprep.subr.bf16.mxu0 0
    %175 = vmatpush1.bf16.msra.mxu0 %v157
    %176 = vmatprep.subr.bf16.mxu0 0
    %177 = vmatpush1.bf16.msra.mxu0 %v158
    %178 = vmatprep.subr.bf16.mxu0 0
    %179 = vmatpush1.bf16.msra.mxu0 %v159
    %180 = vmatprep.subr.bf16.mxu0 0
    %181 = vmatpush1.bf16.msra.mxu0 %v160
    %182 = vmatprep.subr.bf16.mxu0 0
    %183 = vmatpush1.bf16.msra.mxu0 %v161
    %184 = vmatprep.subr.bf16.mxu0 0
    %185 = vmatpush1.bf16.msra.mxu0 %v162
    %186 = vmatprep.subr.bf16.mxu0 0
    %187 = vmatpush1.bf16.msra.mxu0 %v163
    %188 = vmatprep.subr.bf16.mxu0 0
    %189 = vmatpush1.bf16.msra.mxu0 0
    %190 = vmatprep.subr.bf16.mxu0 0
    %191 = vmatpush1.bf16.msra.mxu0 0
    %192 = vmatprep.subr.bf16.mxu0 0
    %193 = vmatpush1.bf16.msra.mxu0 0
    %194 = vmatprep.subr.bf16.mxu0 0
    %195 = vmatpush1.bf16.msra.mxu0 0
    %196 = vmatprep.subr.bf16.mxu0 0
    %197 = vmatpush1.bf16.msra.mxu0 0
    %198 = vmatprep.subr.bf16.mxu0 0
    %199 = vmatpush1.bf16.msra.mxu0 0
    %200 = vmatprep.subr.bf16.mxu0 0
    %201 = vmatpush1.bf16.msra.mxu0 0
    %202 = vmatprep.subr.bf16.mxu0 0
    %203 = vmatpush1.bf16.msra.mxu0 0
    %204 = vmatprep.mubr.bf16.mxu0 0
    %205 = vmatmul.mubr.bf16.gmra.mrb[0].mxu0 %v100
    %v206 = vpop.f32.mrb[0].mxu0
    %v207 = vadd.f32 %v122, %v206
    %v208 = vpop.f32.mrb[0].mxu0
    %v209 = vpop.f32.mrb[0].mxu0
    %v210 = vadd.f32 %v122, %v209
    %v211 = vpop.f32.mrb[0].mxu0
    %212 = vdwg.mxu0
    %213 = vst [vmem:[%s5] sm:$0xff] %v207
    %214 = vst [vmem:[%s5 + $0x8] sm:$0xff] %v210
    // Predicated region
    $region26: #{net_forward.1} parent=1 // pred_check
      _
    $region27: #{net_forward.1} parent=1 // pred_check_branch
      %216 = sbr.rel (0) target = $region29
    $region28: #{net_forward.1} parent=1 // pred_region
      _
    $region29: #{net_forward.1} parent=1 // pred_fallthru
      _
    // Predicated region
    $region30: #{net_forward.1} parent=1 // pred_check
      _
    $region31: #{net_forward.1} parent=1 // pred_check_branch
      %218 = sbr.rel (0) target = $region33
    $region32: #{net_forward.1} parent=1 // pred_region
      _
    $region33: #{net_forward.1} parent=1 // pred_fallthru
      _
    %219 = vsyncpa [#allocation3], 1

</llo_original>
